<compile_context>
chip_gen: v7x
topology: tpu7x:2x2x1
jax: 0.10.0
libtpu: 0.0.40
codegen_flags: <defaults>
</compile_context>

<pallas_src>
import jax
import jax.numpy as jnp
from jax import lax
from jax.experimental import pallas as pl
from jax.experimental.pallas import tpu as pltpu


def ffnn_kernel(x_ref, w1_ref, b1_ref, w2_ref, b2_ref, o_ref):
    # Hidden layer: relu(x @ W1^T + b1).  w1_ref holds W1^T = (input_dim, h), already
    # transposed once in the wrapper, so this is a plain (M,K)x(K,N) MXU matmul.
    # The batch tile is cast to the weight dtype here (no extra HBM pass for bf16).
    x = x_ref[...].astype(w1_ref.dtype)
    h = lax.dot_general(
        x, w1_ref[...],
        dimension_numbers=(((1,), (0,)), ((), ())),
        preferred_element_type=jnp.float32,
    ) + b1_ref[...]                      # f32 accumulate + f32 bias
    h = jnp.maximum(h, 0.0)              # ReLU in f32 (VPU)

    # Output layer, transposed: logits_T = W2 @ h^T -> (out_dim, tb).  Class axis on
    # sublanes, batch on lanes => lane-dense output store.  Contraction is last-axis
    # to last-axis (native MXU "rows dot rows" form), so no per-step transpose.
    logits_t = lax.dot_general(
        w2_ref[...], h.astype(w2_ref.dtype),
        dimension_numbers=(((1,), (1,)), ((), ())),
        preferred_element_type=jnp.float32,
    ) + b2_ref[...]                      # b2 is (out_dim, 1), lane-broadcast add

    # Numerically-stable log-softmax over the class (sublane) axis — cheap XLU work
    # on only out_dim=5 rows.  Ragged last tiles only affect discarded columns.
    m = jnp.max(logits_t, axis=0, keepdims=True)
    shifted = logits_t - m
    lse = jnp.log(jnp.sum(jnp.exp(shifted), axis=0, keepdims=True))
    o_ref[...] = (shifted - lse).astype(o_ref.dtype)


def _vmem_budget_bytes():
    """Per-TensorCore VMEM budget with headroom.

    Clamped to 64 MiB (the v7x per-TC size) in case get_tpu_info() reports a
    chip-aggregate figure; VMEM is not a binding constraint at these shapes.
    """
    try:
        physical = int(pltpu.get_tpu_info().vmem_capacity_bytes)
    except Exception:
        physical = 64 << 20
    physical = min(physical, 64 << 20)
    return int(0.75 * physical)


def _auto_batch_tile(B, input_dim, h_dim, out_dim, x_itemsize, tile_budget):
    """Largest 128-aligned batch tile (cap 2048) whose working set fits the budget.

    The kernel is HBM-streaming-bound on x, so bigger tiles amortize the ~0.35 us
    per-grid-step overhead; 128-alignment is required by the lane-dense output block.
    """
    if B < 128:
        return B                                  # single block equal to the full dim
    cap = min(2048, (B // 128) * 128)
    tb = 128
    for cand in range(cap, 127, -128):
        tile_bytes = (2 * cand * input_dim * x_itemsize   # double-buffered x tile
                      + 2 * cand * out_dim * 4            # double-buffered output tile
                      + cand * h_dim * 4                  # hidden intermediate (f32)
                      + cand * out_dim * 4)               # logits intermediate (f32)
        if tile_bytes <= tile_budget:
            tb = cand
            break
    # Keep >=2 grid steps for megacore sharding on v7x when the batch is big enough.
    if B > 256 and pl.cdiv(B, tb) == 1:
        tb = max(128, ((B // 2) // 128) * 128)
    return tb


def ffnn_forward(x, w1, b1, w2, b2, *, batch_tile=None, compute_dtype=None):
    """x: (B, input_dim). w1: (h, input_dim), b1: (h,), w2: (5, h), b2: (5,).

    compute_dtype: optional dtype (e.g. jnp.bfloat16) for the matmul operands; only
    the weights are cast in the wrapper — the x tile is cast inside the kernel, and
    accumulation / bias / ReLU / log-softmax stay in float32.
    Returns (B, 5) log-probabilities.
    """
    B, input_dim = x.shape
    h_dim = w1.shape[0]
    out_dim = w2.shape[0]

    if compute_dtype is not None:
        w1 = w1.astype(compute_dtype)
        w2 = w2.astype(compute_dtype)
    w1_t = w1.T                                    # one-time tiny transpose -> (input_dim, h)
    b1_2d = b1.astype(jnp.float32).reshape(1, h_dim)
    b2_2d = b2.astype(jnp.float32).reshape(out_dim, 1)

    x_item = jnp.dtype(x.dtype).itemsize
    w_item = jnp.dtype(w1.dtype).itemsize

    # --- VMEM budgeting --------------------------------------------------------
    budget = _vmem_budget_bytes()
    weight_bytes = (h_dim * input_dim + out_dim * h_dim) * w_item + (h_dim + out_dim) * 4
    tile_budget = max(budget - weight_bytes, 4 << 20)

    # --- batch tile selection (128-aligned for the lane-dense output block) ----
    if batch_tile is None:
        tb = _auto_batch_tile(B, input_dim, h_dim, out_dim, x_item, tile_budget)
    else:
        tb = min(int(batch_tile), B)
        if tb < B:
            tb = min(max(128, (tb // 128) * 128), B)
    if tb >= B:
        tb = B

    per_tile = (2 * tb * input_dim * x_item + 2 * tb * out_dim * 4
                + tb * h_dim * 4 + tb * out_dim * 4)
    vmem_limit = int(min(budget, max(32 << 20, 2 * (weight_bytes + per_tile))))

    grid = (pl.cdiv(B, tb),)

    cost = pl.CostEstimate(
        flops=2 * B * input_dim * h_dim + 2 * B * h_dim * out_dim,
        transcendentals=B * (out_dim + 1),          # exp per class + log per row
        bytes_accessed=(B * input_dim * x_item + weight_bytes + B * out_dim * 4),
    )

    # NOTE: pipeline_mode=pl.Buffered(3) on the x spec is an optional v7x tweak for
    # small tiles; skipped here since tiles are already large at realistic B.
    out_t = pl.pallas_call(
        ffnn_kernel,
        out_shape=jax.ShapeDtypeStruct((out_dim, B), jnp.float32),
        grid=grid,
        in_specs=[
            pl.BlockSpec((tb, input_dim), lambda i: (i, 0)),       # batch-tiled activations
            pl.BlockSpec((input_dim, h_dim), lambda i: (0, 0)),    # VMEM-resident W1^T
            pl.BlockSpec((1, h_dim), lambda i: (0, 0)),            # b1 row
            pl.BlockSpec((out_dim, h_dim), lambda i: (0, 0)),      # VMEM-resident W2
            pl.BlockSpec((out_dim, 1), lambda i: (0, 0)),          # b2 column
        ],
        out_specs=pl.BlockSpec((out_dim, tb), lambda i: (0, i)),   # lane-dense output
        compiler_params=pltpu.CompilerParams(
            dimension_semantics=("parallel",),
            vmem_limit_bytes=vmem_limit,
        ),
        cost_estimate=cost,
    )(x, w1_t, b1_2d, w2, b2_2d)

    return out_t.T                                  # (out_dim, B) -> (B, out_dim), tiny XLA op


if __name__ == "__main__":
    # Small shapes consistent with the module: FFNN(input_dim, h), output_dim = 5.
    B, input_dim, hidden = 512, 128, 32
    out_dim = 5

    key = jax.random.PRNGKey(0)
    kx, kw1, kb1, kw2, kb2 = jax.random.split(key, 5)

    # Deterministic init mimicking nn.Linear's U(-1/sqrt(fan_in), 1/sqrt(fan_in)).
    bound1 = 1.0 / jnp.sqrt(jnp.float32(input_dim))
    bound2 = 1.0 / jnp.sqrt(jnp.float32(hidden))
    w1 = jax.random.uniform(kw1, (hidden, input_dim), jnp.float32, -bound1, bound1)
    b1 = jax.random.uniform(kb1, (hidden,), jnp.float32, -bound1, bound1)
    w2 = jax.random.uniform(kw2, (out_dim, hidden), jnp.float32, -bound2, bound2)
    b2 = jax.random.uniform(kb2, (out_dim,), jnp.float32, -bound2, bound2)
    x = jax.random.normal(kx, (B, input_dim), jnp.float32)

    # Pure-JAX reference.
    hidden_ref = jnp.maximum(x @ w1.T + b1, 0.0)
    logits_ref = hidden_ref @ w2.T + b2
    ref = jax.nn.log_softmax(logits_ref, axis=-1)

    # 1) f32, explicit 128-row tiles (grid of 4) — exercises pipelining + lane-dense
    #    tiled output blocks.
    out = jax.block_until_ready(ffnn_forward(x, w1, b1, w2, b2, batch_tile=128))
    assert out.shape == (B, out_dim)
    assert jnp.allclose(out, ref, atol=1e-4, rtol=1e-4)

    # 2) f32, auto tile selection (>=2 grid steps so v7x megacore can split the batch).
    out_auto = jax.block_until_ready(ffnn_forward(x, w1, b1, w2, b2))
    assert jnp.allclose(out_auto, ref, atol=1e-4, rtol=1e-4)

    # 3) small batch: single untiled block, B not a multiple of 128.
    out_small = jax.block_until_ready(ffnn_forward(x[:48], w1, b1, w2, b2))
    assert out_small.shape == (48, out_dim)
    assert jnp.allclose(out_small, ref[:48], atol=1e-4, rtol=1e-4)

    # 4) bf16 matmul operands: weights cast in wrapper, x tile cast in-kernel,
    #    f32 accumulation and f32 log-softmax.
    out_bf16 = jax.block_until_ready(
        ffnn_forward(x, w1, b1, w2, b2, batch_tile=128, compute_dtype=jnp.bfloat16))
    assert out_bf16.shape == (B, out_dim)
    assert bool(jnp.all(jnp.isfinite(out_bf16)))
    assert jnp.allclose(out_bf16, ref, atol=5e-2, rtol=5e-2)

    print("KERNEL_OK")
</pallas_src>

<mosaic_0001>
module attributes {stable_mosaic.version = 11 : i64} {
  func.func @ffnn_kernel(%arg0: i32, %arg1: memref<128x128xf32, #tpu.memory_space<vmem>>, %arg2: memref<128x32xf32, #tpu.memory_space<vmem>>, %arg3: memref<1x32xf32, #tpu.memory_space<vmem>>, %arg4: memref<5x32xf32, #tpu.memory_space<vmem>>, %arg5: memref<5x1xf32, #tpu.memory_space<vmem>>, %arg6: memref<5x128xf32, #tpu.memory_space<vmem>>) attributes {dimension_semantics = [#tpu.dimension_semantics<parallel>], iteration_bounds = array<i64: 4>, scalar_prefetch = 0 : i64, scratch_operands = 0 : i64, tpu.core_type = #tpu.core_type<tc>, window_params = [{transform_indices = @transform_0, window_bounds = array<i64: 128, 128>}, {pipeline_mode = #tpu.pipeline_mode<synchronous>, transform_indices = @transform_1, window_bounds = array<i64: 128, 32>}, {pipeline_mode = #tpu.pipeline_mode<synchronous>, transform_indices = @transform_2, window_bounds = array<i64: 1, 32>}, {pipeline_mode = #tpu.pipeline_mode<synchronous>, transform_indices = @transform_3, window_bounds = array<i64: 5, 32>}, {pipeline_mode = #tpu.pipeline_mode<synchronous>, transform_indices = @transform_4, window_bounds = array<i64: 5, 1>}, {transform_indices = @transform_5, window_bounds = array<i64: 5, 128>}]} {
    %c0 = arith.constant 0 : index
    %c0_0 = arith.constant 0 : index
    %0 = vector.load %arg1[%c0, %c0_0] : memref<128x128xf32, #tpu.memory_space<vmem>>, vector<128x128xf32>
    %c0_1 = arith.constant 0 : index
    %c0_2 = arith.constant 0 : index
    %1 = vector.load %arg2[%c0_1, %c0_2] : memref<128x32xf32, #tpu.memory_space<vmem>>, vector<128x32xf32>
    %cst = arith.constant dense<0.000000e+00> : vector<128x32xf32>
    %2 = tpu.matmul %0, %1, %cst {dimension_numbers = #tpu.dot_dimension_numbers<[1], [0], [0], [1], [0, 0, 1, 1], [], []>} : vector<128x128xf32>, vector<128x32xf32>, vector<128x32xf32> -> vector<128x32xf32>
    %c0_3 = arith.constant 0 : index
    %c0_4 = arith.constant 0 : index
    %3 = vector.load %arg3[%c0_3, %c0_4] : memref<1x32xf32, #tpu.memory_space<vmem>>, vector<1x32xf32>
    %4 = vector.broadcast %3 : vector<1x32xf32> to vector<128x32xf32>
    %5 = arith.addf %2, %4 : vector<128x32xf32>
    %cst_5 = arith.constant 0.000000e+00 : f32
    %6 = vector.broadcast %cst_5 : f32 to vector<128x32xf32>
    %7 = arith.maximumf %5, %6 : vector<128x32xf32>
    %c0_6 = arith.constant 0 : index
    %c0_7 = arith.constant 0 : index
    %8 = vector.load %arg4[%c0_6, %c0_7] : memref<5x32xf32, #tpu.memory_space<vmem>>, vector<5x32xf32>
    %cst_8 = arith.constant dense<0.000000e+00> : vector<5x128xf32>
    %9 = tpu.matmul %8, %7, %cst_8 {dimension_numbers = #tpu.dot_dimension_numbers<[1], [1], [0], [0], [0, 0, 1, 0], [], []>} : vector<5x32xf32>, vector<128x32xf32>, vector<5x128xf32> -> vector<5x128xf32>
    %c0_9 = arith.constant 0 : index
    %c0_10 = arith.constant 0 : index
    %10 = vector.load %arg5[%c0_9, %c0_10] : memref<5x1xf32, #tpu.memory_space<vmem>>, vector<5x1xf32>
    %11 = vector.broadcast %10 : vector<5x1xf32> to vector<5x128xf32>
    %12 = arith.addf %9, %11 : vector<5x128xf32>
    %cst_11 = arith.constant dense<0xFF800000> : vector<128xf32>
    %13 = vector.multi_reduction <maximumf>, %12, %cst_11 [0] : vector<5x128xf32> to vector<128xf32>
    %14 = vector.shape_cast %13 : vector<128xf32> to vector<1x128xf32>
    %15 = vector.broadcast %14 : vector<1x128xf32> to vector<5x128xf32>
    %16 = arith.subf %12, %15 : vector<5x128xf32>
    %17 = math.exp %16 : vector<5x128xf32>
    %cst_12 = arith.constant dense<0.000000e+00> : vector<128xf32>
    %18 = vector.multi_reduction <add>, %17, %cst_12 [0] : vector<5x128xf32> to vector<128xf32>
    %19 = vector.shape_cast %18 : vector<128xf32> to vector<1x128xf32>
    %20 = math.log %19 : vector<1x128xf32>
    %21 = vector.broadcast %20 : vector<1x128xf32> to vector<5x128xf32>
    %22 = arith.subf %16, %21 : vector<5x128xf32>
    %c0_13 = arith.constant 0 : index
    %c0_14 = arith.constant 0 : index
    %23 = vector.load %arg6[%c0_13, %c0_14] : memref<5x128xf32, #tpu.memory_space<vmem>>, vector<5x128xf32>
    tpu.vector_store %arg6[%c0_13, %c0_14], %22 {strides = array<i32>} : memref<5x128xf32, #tpu.memory_space<vmem>>, vector<5x128xf32>,
    return
  }
  func.func @transform_0(%arg0: i32) -> (i32, i32) {
    %c0_i32 = arith.constant 0 : i32
    %c0_i32_0 = arith.constant 0 : i32
    return %arg0, %c0_i32 : i32, i32
  }
  func.func @transform_1(%arg0: i32) -> (i32, i32) {
    %c0_i32 = arith.constant 0 : i32
    %c0_i32_0 = arith.constant 0 : i32
    %c0_i32_1 = arith.constant 0 : i32
    return %c0_i32, %c0_i32_0 : i32, i32
  }
  func.func @transform_2(%arg0: i32) -> (i32, i32) {
    %c0_i32 = arith.constant 0 : i32
    %c0_i32_0 = arith.constant 0 : i32
    %c0_i32_1 = arith.constant 0 : i32
    return %c0_i32, %c0_i32_0 : i32, i32
  }
  func.func @transform_3(%arg0: i32) -> (i32, i32) {
    %c0_i32 = arith.constant 0 : i32
    %c0_i32_0 = arith.constant 0 : i32
    %c0_i32_1 = arith.constant 0 : i32
    return %c0_i32, %c0_i32_0 : i32, i32
  }
  func.func @transform_4(%arg0: i32) -> (i32, i32) {
    %c0_i32 = arith.constant 0 : i32
    %c0_i32_0 = arith.constant 0 : i32
    %c0_i32_1 = arith.constant 0 : i32
    return %c0_i32, %c0_i32_0 : i32, i32
  }
  func.func @transform_5(%arg0: i32) -> (i32, i32) {
    %c0_i32 = arith.constant 0 : i32
    %c0_i32_0 = arith.constant 0 : i32
    return %c0_i32, %arg0 : i32, i32
  }
}

</mosaic_0001>

<llo_original>
// kernel: tpu_custom_call.1
$region0: #{tpu_custom_call.1}
  #allocation0 [shape = 'u32[]', space=smem, size = 0x4, offset = 0x4, fixed_abs, tag = 'smem constant byte address 0x4 - core index']
  #allocation1 [shape = 'u32[144,128]{1,0:T(1,128)}', space=vmem, size = 0x12000, scoped, tag = 'internal scratch']
  %s0 = inlined_call_operand.hbm [shape: f32[512,128], index: 0, kind: input, shape index: {}]
  %s1 = inlined_call_operand.vmem [shape: f32[128,32], index: 1, kind: input, shape index: {}]
  %s2 = inlined_call_operand.vmem [shape: f32[1,32], index: 2, kind: input, shape index: {}]
  %s3 = inlined_call_operand.vmem [shape: f32[5,32], index: 3, kind: input, shape index: {}]
  %s4 = inlined_call_operand.vmem [shape: f32[5,1], index: 4, kind: input, shape index: {}]
  %s5 = inlined_call_operand.hbm [shape: f32[5,512], index: 5, kind: output, shape index: {}]
  %s6 = sld [smem:[#allocation0]]
  $region57: #{tpu_custom_call.1} parent=0
    _
  %s8 = ssub.s32 1, %s6
  %s9 = scalar_select 0, %s8, %s6
  $region1: #{tpu_custom_call.1} parent=0
    #allocation2 [shape = 'u8[131072]{0}', space=vmem, size = 0x20000, scoped, tag = 'input window, operand 0']
    #allocation3 [shape = 's32[2]{0}', space=sflag, size = 0x8, scoped, tag = 'scoped memory for tpu_custom_call.1']
    #allocation4 [shape = 's32[2]{0}', space=sflag, size = 0x8, scoped, tag = 'scoped memory for tpu_custom_call.1']
    #allocation5 [shape = 'u8[8192]{0}', space=vmem, size = 0x2000, scoped, tag = 'output window, operand 0']
    %10 = vsyncpa [#allocation3], 0
    %s11 = scalar_lea.sflag [#allocation3], 1
    %12 = vsyncpa %s11, 0
    %13 = vsyncpa [#allocation4], 0
    %s14 = scalar_lea.sflag [#allocation4], 1
    %15 = vsyncpa %s14, 0
    loop: start=0, step=1, limit=6
    $region2: #{tpu_custom_call.1} parent=1 // loop_pre_header
      _
    $region3: #{tpu_custom_call.1} parent=1 // loop_header
      %s17 = sphi 0, %s21
      %p18 = scmp.ge.s32.totalorder %s17, 6
      %s27 = sphi 0, %s29
      %s30 = sphi 0, %s27
      %s31 = sphi 0, %s30
      %s47 = sphi 0, %s31
      %s51 = sphi 0, %s51
      %s53 = sphi 0, %s51
      %s54 = sphi 0, %s53
      %s68 = sphi 0, %s54
      %s72 = sphi 0, %s72
      %s74 = sphi 0, %s72
      %s75 = sphi 0, %s74
      %s89 = sphi 0, %s75
      %s93 = sphi 0, %s93
      %s95 = sphi 0, %s93
      %s96 = sphi 0, %s95
      %s110 = sphi 0, %s96
      %s114 = sphi 0, %s114
      %s116 = sphi 0, %s114
      %s117 = sphi 0, %s116
      %s131 = sphi 0, %s117
      %s137 = sphi 0, %s139
      %s140 = sphi 0, %s137
      %s141 = sphi 0, %s140
      %s157 = sphi 0, %s141
    $region4: #{tpu_custom_call.1} parent=1 // loop_header_branch
      %20 = sbr.rel (%p18) target = $region8
    $region5: #{tpu_custom_call.1} parent=1 // loop_body
      %s22 = ssub.s32 %s17, 1
      %s23 = ssub.s32 %s17, 2
      %s24 = sadd.s32 %s17, 1
      %s25 = ssub.s32 %s17, %s24
      %p26 = scmp.eq.s32.totalorder %s25, 0
      %s28 = sadd.s32 %s27, 1
      %s29 = scalar_select %p26, %s27, %s28
      %p32 = pneg %p26
      %p33 = scmp.eq.s32.totalorder %s17, 3
      %p34 = por %p32, %p33
      %p35 = scmp.ne.s32.totalorder %s27, %s30
      %p36 = scmp.eq.s32.totalorder %s17, 0
      %p37 = por %p35, %p36
      %p38 = scmp.ne.s32.totalorder %s27, %s30
      %p39 = scmp.eq.s32.totalorder %s22, 3
      %p40 = por %p38, %p39
      %p41 = scmp.ne.s32.totalorder %s30, %s31
      %p42 = scmp.eq.s32.totalorder %s22, 0
      %p43 = por %p41, %p42
      %p44 = scmp.ne.s32.totalorder %s30, %s31
      %p45 = scmp.eq.s32.totalorder %s23, 3
      %p46 = por %p44, %p45
      %p48 = scmp.ne.s32.totalorder %s31, %s47
      %p49 = scmp.eq.s32.totalorder %s23, 0
      %p50 = por %p48, %p49
      %s52 = sadd.s32 %s51, 1
      %p55 = scmp.eq.s32.totalorder %s17, 3
      %p56 = scmp.ne.s32.totalorder %s51, %s53
      %p57 = scmp.eq.s32.totalorder %s17, 0
      %p58 = por %p56, %p57
      %p59 = scmp.ne.s32.totalorder %s51, %s53
      %p60 = scmp.eq.s32.totalorder %s22, 3
      %p61 = por %p59, %p60
      %p62 = scmp.ne.s32.totalorder %s53, %s54
      %p63 = scmp.eq.s32.totalorder %s22, 0
      %p64 = por %p62, %p63
      %p65 = scmp.ne.s32.totalorder %s53, %s54
      %p66 = scmp.eq.s32.totalorder %s23, 3
      %p67 = por %p65, %p66
      %p69 = scmp.ne.s32.totalorder %s54, %s68
      %p70 = scmp.eq.s32.totalorder %s23, 0
      %p71 = por %p69, %p70
      %s73 = sadd.s32 %s72, 1
      %p76 = scmp.eq.s32.totalorder %s17, 3
      %p77 = scmp.ne.s32.totalorder %s72, %s74
      %p78 = scmp.eq.s32.totalorder %s17, 0
      %p79 = por %p77, %p78
      %p80 = scmp.ne.s32.totalorder %s72, %s74
      %p81 = scmp.eq.s32.totalorder %s22, 3
      %p82 = por %p80, %p81
      %p83 = scmp.ne.s32.totalorder %s74, %s75
      %p84 = scmp.eq.s32.totalorder %s22, 0
      %p85 = por %p83, %p84
      %p86 = scmp.ne.s32.totalorder %s74, %s75
      %p87 = scmp.eq.s32.totalorder %s23, 3
      %p88 = por %p86, %p87
      %p90 = scmp.ne.s32.totalorder %s75, %s89
      %p91 = scmp.eq.s32.totalorder %s23, 0
      %p92 = por %p90, %p91
      %s94 = sadd.s32 %s93, 1
      %p97 = scmp.eq.s32.totalorder %s17, 3
      %p98 = scmp.ne.s32.totalorder %s93, %s95
      %p99 = scmp.eq.s32.totalorder %s17, 0
      %p100 = por %p98, %p99
      %p101 = scmp.ne.s32.totalorder %s93, %s95
      %p102 = scmp.eq.s32.totalorder %s22, 3
      %p103 = por %p101, %p102
      %p104 = scmp.ne.s32.totalorder %s95, %s96
      %p105 = scmp.eq.s32.totalorder %s22, 0
      %p106 = por %p104, %p105
      %p107 = scmp.ne.s32.totalorder %s95, %s96
      %p108 = scmp.eq.s32.totalorder %s23, 3
      %p109 = por %p107, %p108
      %p111 = scmp.ne.s32.totalorder %s96, %s110
      %p112 = scmp.eq.s32.totalorder %s23, 0
      %p113 = por %p111, %p112
      %s115 = sadd.s32 %s114, 1
      %p118 = scmp.eq.s32.totalorder %s17, 3
      %p119 = scmp.ne.s32.totalorder %s114, %s116
      %p120 = scmp.eq.s32.totalorder %s17, 0
      %p121 = por %p119, %p120
      %p122 = scmp.ne.s32.totalorder %s114, %s116
      %p123 = scmp.eq.s32.totalorder %s22, 3
      %p124 = por %p122, %p123
      %p125 = scmp.ne.s32.totalorder %s116, %s117
      %p126 = scmp.eq.s32.totalorder %s22, 0
      %p127 = por %p125, %p126
      %p128 = scmp.ne.s32.totalorder %s116, %s117
      %p129 = scmp.eq.s32.totalorder %s23, 3
      %p130 = por %p128, %p129
      %p132 = scmp.ne.s32.totalorder %s117, %s131
      %p133 = scmp.eq.s32.totalorder %s23, 0
      %p134 = por %p132, %p133
      %s135 = ssub.s32 %s17, %s24
      %p136 = scmp.eq.s32.totalorder %s135, 0
      %s138 = sadd.s32 %s137, 1
      %s139 = scalar_select %p136, %s137, %s138
      %p142 = pneg %p136
      %p143 = scmp.eq.s32.totalorder %s17, 3
      %p144 = por %p142, %p143
      %p145 = scmp.ne.s32.totalorder %s137, %s140
      %p146 = scmp.eq.s32.totalorder %s17, 0
      %p147 = por %p145, %p146
      %p148 = scmp.ne.s32.totalorder %s137, %s140
      %p149 = scmp.eq.s32.totalorder %s22, 3
      %p150 = por %p148, %p149
      %p151 = scmp.ne.s32.totalorder %s140, %s141
      %p152 = scmp.eq.s32.totalorder %s22, 0
      %p153 = por %p151, %p152
      %p154 = scmp.ne.s32.totalorder %s140, %s141
      %p155 = scmp.eq.s32.totalorder %s23, 3
      %p156 = por %p154, %p155
      %p158 = scmp.ne.s32.totalorder %s141, %s157
      %p159 = scmp.eq.s32.totalorder %s23, 0
      %p160 = por %p158, %p159
      %p161 = scmp.le.s32.totalorder 1, %s17
      %p162 = scmp.lt.s32.totalorder %s17, 5
      %p163 = pnand %p161, %p162
      %p164 = pneg %p163
      // Predicated region
      $region9: #{tpu_custom_call.1} parent=5 // pred_check
        _
      $region10: #{tpu_custom_call.1} parent=5 // pred_check_branch
        %166 = sbr.rel (%p163) target = $region12
      $region11: #{tpu_custom_call.1} parent=5 // pred_region
        %s167 = ssub.s32 %s17, 1
        // Predicated region
        $region13: #{tpu_custom_call.1} parent=11 // pred_check
          %p168 = pneg %p64
        $region14: #{tpu_custom_call.1} parent=11 // pred_check_branch
          %170 = sbr.rel (%p168) target = $region16
        $region15: #{tpu_custom_call.1} parent=11 // pred_region
          _
        $region16: #{tpu_custom_call.1} parent=11 // pred_fallthru
          _
        // Predicated region
        $region17: #{tpu_custom_call.1} parent=11 // pred_check
          %p171 = pneg %p85
        $region18: #{tpu_custom_call.1} parent=11 // pred_check_branch
          %173 = sbr.rel (%p171) target = $region20
        $region19: #{tpu_custom_call.1} parent=11 // pred_region
          _
        $region20: #{tpu_custom_call.1} parent=11 // pred_fallthru
          _
        // Predicated region
        $region21: #{tpu_custom_call.1} parent=11 // pred_check
          %p174 = pneg %p106
        $region22: #{tpu_custom_call.1} parent=11 // pred_check_branch
          %176 = sbr.rel (%p174) target = $region24
        $region23: #{tpu_custom_call.1} parent=11 // pred_region
          _
        $region24: #{tpu_custom_call.1} parent=11 // pred_fallthru
          _
        // Predicated region
        $region25: #{tpu_custom_call.1} parent=11 // pred_check
          %p177 = pneg %p127
        $region26: #{tpu_custom_call.1} parent=11 // pred_check_branch
          %179 = sbr.rel (%p177) target = $region28
        $region27: #{tpu_custom_call.1} parent=11 // pred_region
          _
        $region28: #{tpu_custom_call.1} parent=11 // pred_fallthru
          _
      $region12: #{tpu_custom_call.1} parent=5 // pred_fallthru
        _
      %p180 = scmp.lt.s32.totalorder %s17, 4
      // Predicated region
      $region29: #{tpu_custom_call.1} parent=5 // pred_check
        %p181 = pneg %p180
      $region30: #{tpu_custom_call.1} parent=5 // pred_check_branch
        %183 = sbr.rel (%p181) target = $region32
      $region31: #{tpu_custom_call.1} parent=5 // pred_region
        // Predicated region
        $region33: #{tpu_custom_call.1} parent=31 // pred_check
          %p184 = pneg %p37
        $region34: #{tpu_custom_call.1} parent=31 // pred_check_branch
          %186 = sbr.rel (%p184) target = $region36
        $region35: #{tpu_custom_call.1} parent=31 // pred_region
          %s187 = sand.u32 %s27, 1
          %s188 = scalar_lea.sflag [#allocation3], %s187
          %s189 = sand.u32 %s27, 1
          %s190 = smul.addr %s189, 128
          %s191 = scalar_lea.vmem [#allocation2], %s190
          %s192 = smul.u32 16, %s17
          %s194 = ssub.s32 2048, 2048
          %195 = vsyncadd %s188, %s194
          %s196 = smul.addr %s192, 128
          %s197 = scalar_lea.hbm %s0, %s196
          %s198 = sshll.u32 %s191, 4
          %s199 = int_to_ptr.vmem [resolvable:$true] %s198
          %204 = dma.hbm_to_vmem [thread:$0]  %s197, 2048, %s199, %s188, 128, 128, 8
        $region36: #{tpu_custom_call.1} parent=31 // pred_fallthru
          _
      $region32: #{tpu_custom_call.1} parent=5 // pred_fallthru
        _
      %p205 = scmp.le.s32.totalorder 1, %s17
      %p206 = scmp.lt.s32.totalorder %s17, 5
      %p207 = pnand %p205, %p206
      %p208 = pneg %p207
      // Predicated region
      $region37: #{tpu_custom_call.1} parent=5 // pred_check
        _
      $region38: #{tpu_custom_call.1} parent=5 // pred_check_branch
        %210 = sbr.rel (%p207) target = $region40
      $region39: #{tpu_custom_call.1} parent=5 // pred_region
        %s211 = ssub.s32 %s17, 1
        %s212 = sand.u32 %s30, 1
        %s213 = scalar_lea.sflag [#allocation3], %s212
        %s214 = sand.u32 %s30, 1
        %s215 = smul.addr %s214, 128
        %s216 = scalar_lea.vmem [#allocation2], %s215
        // Predicated region
        $region41: #{tpu_custom_call.1} parent=39 // pred_check
          %p217 = pneg %p43
        $region42: #{tpu_custom_call.1} parent=39 // pred_check_branch
          %219 = sbr.rel (%p217) target = $region44
        $region43: #{tpu_custom_call.1} parent=39 // pred_region
          %220 = dma.done %s213, 2048
        $region44: #{tpu_custom_call.1} parent=39 // pred_fallthru
          _
        %s221 = sand.u32 %s30, 1
        %s222 = scalar_lea.sflag [#allocation3], %s221
        %s223 = sand.u32 %s30, 1
        %s224 = smul.addr %s223, 128
        %s225 = scalar_lea.vmem [#allocation2], %s224
        %p226 = pneg %p43
        %p227 = pneg %p40
        %p228 = pneg %p64
        %p229 = pneg %p61
        %p230 = pneg %p85
        %p231 = pneg %p82
        %p232 = pneg %p106
        %p233 = pneg %p103
        %p234 = pneg %p127
        %p235 = pneg %p124
        %p236 = pneg %p153
        %p237 = pneg %p150
        %s238 = sand.u32 %s140, 1
        %s239 = scalar_lea.sflag [#allocation4], %s238
        %s240 = sand.u32 %s140, 1
        %s241 = smul.addr %s240, 8
        %s242 = scalar_lea.vmem [#allocation5], %s241
        %s243 = smul.u32 16, %s22
        %v244 = vld [vmem:[%s216] sm:$0xff]
        %v245 = vld [vmem:[%s216 + $0x8] sm:$0xff]
        %v246 = vld [vmem:[%s216 + $0x10] sm:$0xff]
        %v247 = vld [vmem:[%s216 + $0x18] sm:$0xff]
        %v248 = vld [vmem:[%s216 + $0x20] sm:$0xff]
        %v249 = vld [vmem:[%s216 + $0x28] sm:$0xff]
        %v250 = vld [vmem:[%s216 + $0x30] sm:$0xff]
        %v251 = vld [vmem:[%s216 + $0x38] sm:$0xff]
        %v252 = vld [vmem:[%s216 + $0x40] sm:$0xff]
        %v253 = vld [vmem:[%s216 + $0x48] sm:$0xff]
        %v254 = vld [vmem:[%s216 + $0x50] sm:$0xff]
        %v255 = vld [vmem:[%s216 + $0x58] sm:$0xff]
        %v256 = vld [vmem:[%s216 + $0x60] sm:$0xff]
        %v257 = vld [vmem:[%s216 + $0x68] sm:$0xff]
        %v258 = vld [vmem:[%s216 + $0x70] sm:$0xff]
        %v259 = vld [vmem:[%s216 + $0x78] sm:$0xff]
        %v260 = vld [vmem:[%s1] sm:$0xff]
        %v261 = vld [vmem:[%s1 + $0x8] sm:$0xff]
        %v262 = vld [vmem:[%s1 + $0x10] sm:$0xff]
        %v263 = vld [vmem:[%s1 + $0x18] sm:$0xff]
        %v264 = vld [vmem:[%s1 + $0x20] sm:$0xff]
        %v265 = vld [vmem:[%s1 + $0x28] sm:$0xff]
        %v266 = vld [vmem:[%s1 + $0x30] sm:$0xff]
        %v267 = vld [vmem:[%s1 + $0x38] sm:$0xff]
        %v268 = vld [vmem:[%s1 + $0x40] sm:$0xff]
        %v269 = vld [vmem:[%s1 + $0x48] sm:$0xff]
        %v270 = vld [vmem:[%s1 + $0x50] sm:$0xff]
        %v271 = vld [vmem:[%s1 + $0x58] sm:$0xff]
        %v272 = vld [vmem:[%s1 + $0x60] sm:$0xff]
        %v273 = vld [vmem:[%s1 + $0x68] sm:$0xff]
        %v274 = vld [vmem:[%s1 + $0x70] sm:$0xff]
        %v275 = vld [vmem:[%s1 + $0x78] sm:$0xff]
        %v276 = vld [vmem:[%s2] sm:$0x1]
        %v278 = vlaneseq
        %v279 = vshrl.u32 %v278, 7
        %v280 = vsub.s32 0, %v279
        %v281 = vrot.slane %v276, %v280
        %283 = vmatprep.subr.mxu0 0.0
        %284 = vmatpush1.msra.mxu0 %v260
        %285 = vmatprep.subr.mxu0 0.0
        %286 = vmatpush1.msra.mxu0 %v261
        %287 = vmatprep.subr.mxu0 0.0
        %288 = vmatpush1.msra.mxu0 %v262
        %289 = vmatprep.subr.mxu0 0.0
        %290 = vmatpush1.msra.mxu0 %v263
        %291 = vmatprep.subr.mxu0 0.0
        %292 = vmatpush1.msra.mxu0 %v264
        %293 = vmatprep.subr.mxu0 0.0
        %294 = vmatpush1.msra.mxu0 %v265
        %295 = vmatprep.subr.mxu0 0.0
        %296 = vmatpush1.msra.mxu0 %v266
        %297 = vmatprep.subr.mxu0 0.0
        %298 = vmatpush1.msra.mxu0 %v267
        %299 = vmatprep.subr.mxu0 0.0
        %300 = vmatpush1.msra.mxu0 %v268
        %301 = vmatprep.subr.mxu0 0.0
        %302 = vmatpush1.msra.mxu0 %v269
        %303 = vmatprep.subr.mxu0 0.0
        %304 = vmatpush1.msra.mxu0 %v270
        %305 = vmatprep.subr.mxu0 0.0
        %306 = vmatpush1.msra.mxu0 %v271
        %307 = vmatprep.subr.mxu0 0.0
        %308 = vmatpush1.msra.mxu0 %v272
        %309 = vmatprep.subr.mxu0 0.0
        %310 = vmatpush1.msra.mxu0 %v273
        %311 = vmatprep.subr.mxu0 0.0
        %312 = vmatpush1.msra.mxu0 %v274
        %313 = vmatprep.subr.mxu0 0.0
        %314 = vmatpush1.msra.mxu0 %v275
        %315 = vmatprep.subr.mxu0 0.0
        %316 = vmatpush1.msra.mxu0 0.0
        %317 = vmatprep.subr.mxu0 0.0
        %318 = vmatpush1.msra.mxu0 0.0
        %319 = vmatprep.subr.mxu0 0.0
        %320 = vmatpush1.msra.mxu0 0.0
        %321 = vmatprep.subr.mxu0 0.0
        %322 = vmatpush1.msra.mxu0 0.0
        %323 = vmatprep.subr.mxu0 0.0
        %324 = vmatpush1.msra.mxu0 0.0
        %325 = vmatprep.subr.mxu0 0.0
        %326 = vmatpush1.msra.mxu0 0.0
        %327 = vmatprep.subr.mxu0 0.0
        %328 = vmatpush1.msra.mxu0 0.0
        %329 = vmatprep.subr.mxu0 0.0
        %330 = vmatpush1.msra.mxu0 0.0
        %331 = vmatprep.subr.mxu0 0.0
        %332 = vmatpush1.msra.mxu0 0.0
        %333 = vmatprep.subr.mxu0 0.0
        %334 = vmatpush1.msra.mxu0 0.0
        %335 = vmatprep.subr.mxu0 0.0
        %336 = vmatpush1.msra.mxu0 0.0
        %337 = vmatprep.subr.mxu0 0.0
        %338 = vmatpush1.msra.mxu0 0.0
        %339 = vmatprep.subr.mxu0 0.0
        %340 = vmatpush1.msra.mxu0 0.0
        %341 = vmatprep.subr.mxu0 0.0
        %342 = vmatpush1.msra.mxu0 0.0
        %343 = vmatprep.subr.mxu0 0.0
        %344 = vmatpush1.msra.mxu0 0.0
        %345 = vmatprep.subr.mxu0 0.0
        %346 = vmatpush1.msra.mxu0 0.0
        %347 = vmatprep.mubr.f32.mxu0 0.0
        %348 = vmatmul.mubr.f32.gmra.mrb[0].mxu0 %v244
        %v349 = vpop.f32.mrb[0].mxu0
        %v350 = vadd.f32 %v281, %v349
        %v351 = vpop.f32.mrb[0].mxu0
        %352 = vmatprep.mubr.f32.mxu0 0.0
        %353 = vmatmul.mubr.f32.gmra.mrb[0].mxu0 %v245
        %v354 = vpop.f32.mrb[0].mxu0
        %v355 = vadd.f32 %v281, %v354
        %v356 = vpop.f32.mrb[0].mxu0
        %357 = vmatprep.mubr.f32.mxu0 0.0
        %358 = vmatmul.mubr.f32.gmra.mrb[0].mxu0 %v246
        %v359 = vpop.f32.mrb[0].mxu0
        %v360 = vadd.f32 %v281, %v359
        %v361 = vpop.f32.mrb[0].mxu0
        %362 = vmatprep.mubr.f32.mxu0 0.0
        %363 = vmatmul.mubr.f32.gmra.mrb[0].mxu0 %v247
        %v364 = vpop.f32.mrb[0].mxu0
        %v365 = vadd.f32 %v281, %v364
        %v366 = vpop.f32.mrb[0].mxu0
        %367 = vmatprep.mubr.f32.mxu0 0.0
        %368 = vmatmul.mubr.f32.gmra.mrb[0].mxu0 %v248
        %v369 = vpop.f32.mrb[0].mxu0
        %v370 = vadd.f32 %v281, %v369
        %v371 = vpop.f32.mrb[0].mxu0
        %372 = vmatprep.mubr.f32.mxu0 0.0
        %373 = vmatmul.mubr.f32.gmra.mrb[0].mxu0 %v249
        %v374 = vpop.f32.mrb[0].mxu0
        %v375 = vadd.f32 %v281, %v374
        %v376 = vpop.f32.mrb[0].mxu0
        %377 = vmatprep.mubr.f32.mxu0 0.0
        %378 = vmatmul.mubr.f32.gmra.mrb[0].mxu0 %v250
        %v379 = vpop.f32.mrb[0].mxu0
        %v380 = vadd.f32 %v281, %v379
        %v381 = vpop.f32.mrb[0].mxu0
        %382 = vmatprep.mubr.f32.mxu0 0.0
        %383 = vmatmul.mubr.f32.gmra.mrb[0].mxu0 %v251
        %v384 = vpop.f32.mrb[0].mxu0
        %v385 = vadd.f32 %v281, %v384
        %v386 = vpop.f32.mrb[0].mxu0
        %387 = vmatprep.mubr.f32.mxu0 0.0
        %388 = vmatmul.mubr.f32.gmra.mrb[0].mxu0 %v252
        %v389 = vpop.f32.mrb[0].mxu0
        %v390 = vadd.f32 %v281, %v389
        %v391 = vpop.f32.mrb[0].mxu0
        %392 = vmatprep.mubr.f32.mxu0 0.0
        %393 = vmatmul.mubr.f32.gmra.mrb[0].mxu0 %v253
        %v394 = vpop.f32.mrb[0].mxu0
        %v395 = vadd.f32 %v281, %v394
        %v396 = vpop.f32.mrb[0].mxu0
        %397 = vmatprep.mubr.f32.mxu0 0.0
        %398 = vmatmul.mubr.f32.gmra.mrb[0].mxu0 %v254
        %v399 = vpop.f32.mrb[0].mxu0
        %v400 = vadd.f32 %v281, %v399
        %v401 = vpop.f32.mrb[0].mxu0
        %402 = vmatprep.mubr.f32.mxu0 0.0
        %403 = vmatmul.mubr.f32.gmra.mrb[0].mxu0 %v255
        %v404 = vpop.f32.mrb[0].mxu0
        %v405 = vadd.f32 %v281, %v404
        %v406 = vpop.f32.mrb[0].mxu0
        %407 = vmatprep.mubr.f32.mxu0 0.0
        %408 = vmatmul.mubr.f32.gmra.mrb[0].mxu0 %v256
        %v409 = vpop.f32.mrb[0].mxu0
        %v410 = vadd.f32 %v281, %v409
        %v411 = vpop.f32.mrb[0].mxu0
        %412 = vmatprep.mubr.f32.mxu0 0.0
        %413 = vmatmul.mubr.f32.gmra.mrb[0].mxu0 %v257
        %v414 = vpop.f32.mrb[0].mxu0
        %v415 = vadd.f32 %v281, %v414
        %v416 = vpop.f32.mrb[0].mxu0
        %417 = vmatprep.mubr.f32.mxu0 0.0
        %418 = vmatmul.mubr.f32.gmra.mrb[0].mxu0 %v258
        %v419 = vpop.f32.mrb[0].mxu0
        %v420 = vadd.f32 %v281, %v419
        %v421 = vpop.f32.mrb[0].mxu0
        %422 = vmatprep.mubr.f32.mxu0 0.0
        %423 = vmatmul.mubr.f32.gmra.mrb[0].mxu0 %v259
        %v424 = vpop.f32.mrb[0].mxu0
        %v425 = vadd.f32 %v281, %v424
        %v426 = vpop.f32.mrb[0].mxu0
        %427 = vdwg.mxu0
        %v428 = vmax.f32 %v350, 0.0
        %v429 = vmax.f32 %v355, 0.0
        %v430 = vmax.f32 %v360, 0.0
        %v431 = vmax.f32 %v365, 0.0
        %v432 = vmax.f32 %v370, 0.0
        %v433 = vmax.f32 %v375, 0.0
        %v434 = vmax.f32 %v380, 0.0
        %v435 = vmax.f32 %v385, 0.0
        %v436 = vmax.f32 %v390, 0.0
        %v437 = vmax.f32 %v395, 0.0
        %v438 = vmax.f32 %v400, 0.0
        %v439 = vmax.f32 %v405, 0.0
        %v440 = vmax.f32 %v410, 0.0
        %v441 = vmax.f32 %v415, 0.0
        %v442 = vmax.f32 %v420, 0.0
        %v443 = vmax.f32 %v425, 0.0
        %v444 = vld [vmem:[%s3] sm:$0x1f]
        %v445 = vld [vmem:[%s4] sm:$0x1f]
        %447 = vset.pattern.permute.xlu0 0
        %448 = vperm.xlu0 %447, %v445
        %v449 = vpop.permute.xlu0 %448
        %vm451 = vcmask 261120
        %v453 = vsel %vm451, %v444, 0
        %v456 = vsel %vm451, %v428, 0
        %v459 = vsel %vm451, %v429, 0
        %v462 = vsel %vm451, %v430, 0
        %v465 = vsel %vm451, %v431, 0
        %v468 = vsel %vm451, %v432, 0
        %v471 = vsel %vm451, %v433, 0
        %v474 = vsel %vm451, %v434, 0
        %v477 = vsel %vm451, %v435, 0
        %v480 = vsel %vm451, %v436, 0
        %v483 = vsel %vm451, %v437, 0
        %v486 = vsel %vm451, %v438, 0
        %v489 = vsel %vm451, %v439, 0
        %v492 = vsel %vm451, %v440, 0
        %v495 = vsel %vm451, %v441, 0
        %v498 = vsel %vm451, %v442, 0
        %v501 = vsel %vm451, %v443, 0
        %503 = vmatprep.subr.mxu0 0.0
        %504 = vmatpush1.xpose.msra.mxu0 %v456
        %505 = vmatprep.subr.mxu0 0.0
        %506 = vmatpush1.xpose.msra.mxu0 %v459
        %507 = vmatprep.subr.mxu0 0.0
        %508 = vmatpush1.xpose.msra.mxu0 %v462
        %509 = vmatprep.subr.mxu0 0.0
        %510 = vmatpush1.xpose.msra.mxu0 %v465
        %511 = vmatprep.subr.mxu0 0.0
        %512 = vmatpush1.xpose.msra.mxu0 %v468
        %513 = vmatprep.subr.mxu0 0.0
        %514 = vmatpush1.xpose.msra.mxu0 %v471
        %515 = vmatprep.subr.mxu0 0.0
        %516 = vmatpush1.xpose.msra.mxu0 %v474
        %517 = vmatprep.subr.mxu0 0.0
        %518 = vmatpush1.xpose.msra.mxu0 %v477
        %519 = vmatprep.subr.mxu0 0.0
        %520 = vmatpush1.xpose.msra.mxu0 %v480
        %521 = vmatprep.subr.mxu0 0.0
        %522 = vmatpush1.xpose.msra.mxu0 %v483
        %523 = vmatprep.subr.mxu0 0.0
        %524 = vmatpush1.xpose.msra.mxu0 %v486
        %525 = vmatprep.subr.mxu0 0.0
        %526 = vmatpush1.xpose.msra.mxu0 %v489
        %527 = vmatprep.subr.mxu0 0.0
        %528 = vmatpush1.xpose.msra.mxu0 %v492
        %529 = vmatprep.subr.mxu0 0.0
        %530 = vmatpush1.xpose.msra.mxu0 %v495
        %531 = vmatprep.subr.mxu0 0.0
        %532 = vmatpush1.xpose.msra.mxu0 %v498
        %533 = vmatprep.subr.mxu0 0.0
        %534 = vmatpush1.xpose.msra.mxu0 %v501
        %535 = vmatprep.subr.mxu0 0.0
        %536 = vmatpush1.xpose.msra.mxu0 0.0
        %537 = vmatprep.subr.mxu0 0.0
        %538 = vmatpush1.xpose.msra.mxu0 0.0
        %539 = vmatprep.subr.mxu0 0.0
        %540 = vmatpush1.xpose.msra.mxu0 0.0
        %541 = vmatprep.subr.mxu0 0.0
        %542 = vmatpush1.xpose.msra.mxu0 0.0
        %543 = vmatprep.subr.mxu0 0.0
        %544 = vmatpush1.xpose.msra.mxu0 0.0
        %545 = vmatprep.subr.mxu0 0.0
        %546 = vmatpush1.xpose.msra.mxu0 0.0
        %547 = vmatprep.subr.mxu0 0.0
        %548 = vmatpush1.xpose.msra.mxu0 0.0
        %549 = vmatprep.subr.mxu0 0.0
        %550 = vmatpush1.xpose.msra.mxu0 0.0
        %551 = vmatprep.subr.mxu0 0.0
        %552 = vmatpush1.xpose.msra.mxu0 0.0
        %553 = vmatprep.subr.mxu0 0.0
        %554 = vmatpush1.xpose.msra.mxu0 0.0
        %555 = vmatprep.subr.mxu0 0.0
        %556 = vmatpush1.xpose.msra.mxu0 0.0
        %557 = vmatprep.subr.mxu0 0.0
        %558 = vmatpush1.xpose.msra.mxu0 0.0
        %559 = vmatprep.subr.mxu0 0.0
        %560 = vmatpush1.xpose.msra.mxu0 0.0
        %561 = vmatprep.subr.mxu0 0.0
        %562 = vmatpush1.xpose.msra.mxu0 0.0
        %563 = vmatprep.subr.mxu0 0.0
        %564 = vmatpush1.xpose.msra.mxu0 0.0
        %565 = vmatprep.subr.mxu0 0.0
        %566 = vmatpush1.xpose.msra.mxu0 0.0
        %567 = vmatprep.mubr.f32.mxu0 0.0
        %568 = vmatmul.mubr.f32.gmra.mrb[0].mxu0 %v453
        %v569 = vpop.f32.mrb[0].mxu0
        %v570 = vadd.f32 %v449, %v569
        %v571 = vpop.f32.mrb[0].mxu0
        %572 = vdwg.mxu0
        %vm573 = vcmask 1044480
        %v574 = vsel %vm573, %v570, -inf
        %v575 = vrot.slane %v574, 4
        %v576 = vmax.f32 %v574, %v575
        %v577 = vrot.slane %v576, 2
        %v578 = vmax.f32 %v576, %v577
        %v579 = vrot.slane %v578, 1
        %v580 = vmax.f32 %v578, %v579
        %v581 = vsub.f32 %v570, %v580
        %v582 = vmul.f32 %v581, 1.442695
        %v583 = vpow.pop %v582
        %v584 = vsel %vm573, %v583, 0.0
        %v585 = vrot.slane %v584, 4
        %v586 = vadd.f32 %v584, %v585
        %v587 = vrot.slane %v586, 2
        %v588 = vadd.f32 %v586, %v587
        %v589 = vrot.slane %v588, 1
        %v590 = vadd.f32 %v588, %v589
        %v591 = vlog2.pop %v590
        %v592 = vmul.f32 %v591, 0.6931472
        %v593 = vsub.f32 %v581, %v592
        %594 = vst [vmem:[%s242] sm:$0x1f] %v593
        %s595 = sand.u32 %s140, 1
        %s596 = scalar_lea.sflag [#allocation4], %s595
        %s597 = sand.u32 %s140, 1
        %s598 = smul.addr %s597, 8
        %s599 = scalar_lea.vmem [#allocation5], %s598
        // Predicated region
        $region45: #{tpu_custom_call.1} parent=39 // pred_check
          %p600 = pneg %p150
        $region46: #{tpu_custom_call.1} parent=39 // pred_check_branch
          %602 = sbr.rel (%p600) target = $region48
        $region47: #{tpu_custom_call.1} parent=39 // pred_region
          %s604 = ssub.s32 128, 128
          %605 = vsyncadd %s596, %s604
          %s606 = smul.addr %s22, 128
          %s607 = scalar_lea.hbm %s5, %s606
          %s609 = sshll.u32 %s599, 4
          %s610 = int_to_ptr.vmem [resolvable:$true] %s609
          %612 = dma.vmem_to_hbm [thread:$0]  %s610, 128, %s607, %s596
        $region48: #{tpu_custom_call.1} parent=39 // pred_fallthru
          _
      $region40: #{tpu_custom_call.1} parent=5 // pred_fallthru
        _
      %p613 = scmp.le.s32.totalorder 2, %s17
      // Predicated region
      $region49: #{tpu_custom_call.1} parent=5 // pred_check
        %p614 = pneg %p613
      $region50: #{tpu_custom_call.1} parent=5 // pred_check_branch
        %616 = sbr.rel (%p614) target = $region52
      $region51: #{tpu_custom_call.1} parent=5 // pred_region
        %s617 = ssub.s32 %s17, 2
        // Predicated region
        $region53: #{tpu_custom_call.1} parent=51 // pred_check
          %p618 = pneg %p156
        $region54: #{tpu_custom_call.1} parent=51 // pred_check_branch
          %620 = sbr.rel (%p618) target = $region56
        $region55: #{tpu_custom_call.1} parent=51 // pred_region
          %s621 = sand.u32 %s141, 1
          %s622 = scalar_lea.sflag [#allocation4], %s621
          %s623 = sand.u32 %s141, 1
          %s624 = smul.addr %s623, 8
          %s625 = scalar_lea.vmem [#allocation5], %s624
          %626 = dma.done %s622, 128
        $region56: #{tpu_custom_call.1} parent=51 // pred_fallthru
          _
      $region52: #{tpu_custom_call.1} parent=5 // pred_fallthru
        _
    $region6: #{tpu_custom_call.1} parent=1 // loop_footer
      %s21 = sadd.s32 1, %s17
    $region7: #{tpu_custom_call.1} parent=1 // loop_footer_branch
      %16 = sbr.rel target = $region3
    $region8: #{tpu_custom_call.1} parent=1 // loop_exit
      _
    %627 = vsyncpa [#allocation3], 1
    %s628 = scalar_lea.sflag [#allocation3], 1
    %629 = vsyncpa %s628, 1
    %630 = vsyncpa [#allocation4], 1
    %s631 = scalar_lea.sflag [#allocation4], 1
    %632 = vsyncpa %s631, 1

</llo_original>
